<compile_context>
chip_gen: v5e
topology: v5e:2x2
jax: 0.10.0
libtpu: 0.0.40
codegen_flags: <defaults>
</compile_context>

<pallas_src>
import jax
import jax.numpy as jnp
from jax.experimental import pallas as pl
from jax.experimental.pallas import tpu as pltpu

_LANES = 128  # pad fc3 output to one full lane group for dense stores
_BN_EPS = 1e-5


def _mlp_kernel(x_ref,
                w1_ref, b1_ref,
                w2_ref, b2_ref,
                w3_ref, b3_ref,
                o_ref):
    # All math in f32 (MXU is <5% utilized at these K/N, so f32 passes are free).
    x = x_ref[...]                                                   # (tb, D_in)

    # fc1 (+ folded bn1) + relu; dropout(eval) = identity
    h1 = jnp.dot(x, w1_ref[...], preferred_element_type=jnp.float32) + b1_ref[...]
    h1 = jnp.maximum(h1, 0.0)

    # fc2 (+ folded bn2) + relu; dropout(eval) = identity
    h2 = jnp.dot(h1, w2_ref[...], preferred_element_type=jnp.float32) + b2_ref[...]
    h2 = jnp.maximum(h2, 0.0)

    # fc3 (output padded to 128 lanes -> unmasked dense stores)
    o_ref[...] = jnp.dot(h2, w3_ref[...], preferred_element_type=jnp.float32) + b3_ref[...]


def prepare_params(params):
    """One-time prep: fold BatchNorm1d (eval) into fc1/fc2, lane-pad fc3 to 128.

    Call once at param-load time (hoisted out of the per-call forward).
    Returns (w1f, b1f, w2f, b2f, w3p, b3p, num_classes), all f32.
    """
    (w1, b1, g1, be1, rm1, rv1,
     w2, b2, g2, be2, rm2, rv2,
     w3, b3) = params

    s1 = g1 / jnp.sqrt(rv1 + _BN_EPS)
    t1 = be1 - rm1 * s1
    s2 = g2 / jnp.sqrt(rv2 + _BN_EPS)
    t2 = be2 - rm2 * s2

    w1f = (w1 * s1[None, :]).astype(jnp.float32)
    b1f = (b1 * s1 + t1).reshape(1, -1).astype(jnp.float32)
    w2f = (w2 * s2[None, :]).astype(jnp.float32)
    b2f = (b2 * s2 + t2).reshape(1, -1).astype(jnp.float32)

    h2dim, num_classes = w3.shape
    pad = _LANES - num_classes
    w3p = jnp.pad(w3.astype(jnp.float32), ((0, 0), (0, pad)))
    b3p = jnp.pad(b3.reshape(1, -1).astype(jnp.float32), ((0, 0), (0, pad)))

    return (w1f, b1f, w2f, b2f, w3p, b3p, num_classes)


def _choose_tile(batch, block_b):
    """Pick a batch tile: even number of balanced grid steps, multiple of 8."""
    if batch <= block_b:
        return batch, 1
    n_steps = -(-batch // block_b)          # ceil div
    if n_steps % 2:                         # balance across v7x's 2 TensorCores
        n_steps += 1
    tb = -(-batch // n_steps)
    tb = -(-tb // 8) * 8                    # sublane-aligned block height
    n_steps = -(-batch // tb)
    return tb, n_steps


def real_traffic_model_forward(x, folded_params, *, block_b=2048):
    """Fused MLP forward. x: (B, input_dim) f32. Returns (B, num_classes) f32."""
    (w1f, b1f, w2f, b2f, w3p, b3p, num_classes) = folded_params

    B, input_dim = x.shape
    hidden = w1f.shape[1]
    h2dim = w2f.shape[1]

    tb, n_steps = _choose_tile(B, block_b)
    grid = (n_steps,)

    def const_spec(shape):
        # Same block every grid step -> DMA'd once, VMEM-resident for the whole grid.
        return pl.BlockSpec(shape, lambda i: (0, 0))

    out_padded = pl.pallas_call(
        _mlp_kernel,
        out_shape=jax.ShapeDtypeStruct((B, _LANES), jnp.float32),
        grid=grid,
        in_specs=[
            pl.BlockSpec((tb, input_dim), lambda i: (i, 0)),   # x: batch-tiled, pipelined
            const_spec((input_dim, hidden)),                   # w1 (BN-folded)
            const_spec((1, hidden)),                           # b1 (BN-folded)
            const_spec((hidden, h2dim)),                       # w2 (BN-folded)
            const_spec((1, h2dim)),                            # b2 (BN-folded)
            const_spec((h2dim, _LANES)),                       # w3 (lane-padded)
            const_spec((1, _LANES)),                           # b3 (lane-padded)
        ],
        out_specs=pl.BlockSpec((tb, _LANES), lambda i: (i, 0)),
        compiler_params=pltpu.CompilerParams(
            dimension_semantics=("parallel",)),                # v7x megacore; no-op on v5e/v6e
    )(x.astype(jnp.float32), w1f, b1f, w2f, b2f, w3p, b3p)

    return out_padded[:, :num_classes]


def init_params(key, input_dim, hidden_dim=64, num_classes=2):
    h2 = hidden_dim // 2
    ks = jax.random.split(key, 14)

    def linear(kw, kb, fan_in, fan_out):
        bound = 1.0 / jnp.sqrt(fan_in)
        w = jax.random.uniform(kw, (fan_in, fan_out), jnp.float32, -bound, bound)
        b = jax.random.uniform(kb, (fan_out,), jnp.float32, -bound, bound)
        return w, b

    w1, b1 = linear(ks[0], ks[1], input_dim, hidden_dim)
    w2, b2 = linear(ks[2], ks[3], hidden_dim, h2)
    w3, b3 = linear(ks[4], ks[5], h2, num_classes)

    # Non-trivial BatchNorm1d params / running stats so the fold is actually exercised.
    g1 = 1.0 + 0.2 * jax.random.normal(ks[6], (hidden_dim,), jnp.float32)
    be1 = 0.1 * jax.random.normal(ks[7], (hidden_dim,), jnp.float32)
    rm1 = 0.5 * jax.random.normal(ks[8], (hidden_dim,), jnp.float32)
    rv1 = jax.random.uniform(ks[9], (hidden_dim,), jnp.float32, 0.5, 1.5)

    g2 = 1.0 + 0.2 * jax.random.normal(ks[10], (h2,), jnp.float32)
    be2 = 0.1 * jax.random.normal(ks[11], (h2,), jnp.float32)
    rm2 = 0.5 * jax.random.normal(ks[12], (h2,), jnp.float32)
    rv2 = jax.random.uniform(ks[13], (h2,), jnp.float32, 0.5, 1.5)

    return (w1, b1, g1, be1, rm1, rv1,
            w2, b2, g2, be2, rm2, rv2,
            w3, b3)


def reference_forward(x, params):
    """Plain-JAX f32 reference (eval-mode semantics)."""
    (w1, b1, g1, be1, rm1, rv1,
     w2, b2, g2, be2, rm2, rv2,
     w3, b3) = params
    h = x @ w1 + b1
    h = (h - rm1) / jnp.sqrt(rv1 + _BN_EPS) * g1 + be1
    h = jnp.maximum(h, 0.0)
    h = h @ w2 + b2
    h = (h - rm2) / jnp.sqrt(rv2 + _BN_EPS) * g2 + be2
    h = jnp.maximum(h, 0.0)
    return h @ w3 + b3


if __name__ == "__main__":
    key = jax.random.PRNGKey(0)
    k_params, k_x1, k_x2 = jax.random.split(key, 3)

    input_dim = 32
    hidden_dim = 64
    num_classes = 2
    params = init_params(k_params, input_dim, hidden_dim, num_classes)
    folded = prepare_params(params)   # hoisted one-time prep (BN fold + fc3 lane pad)

    # Small-batch check (single grid step).
    batch = 8
    x_small = jax.random.normal(k_x1, (batch, input_dim), jnp.float32)
    out_small = jax.block_until_ready(real_traffic_model_forward(x_small, folded))
    ref_small = reference_forward(x_small, params)
    assert out_small.shape == (batch, num_classes)
    assert jnp.allclose(out_small, ref_small, atol=1e-2, rtol=1e-2), (
        float(jnp.max(jnp.abs(out_small - ref_small))))

    # Multi-step grid (even, balanced tiles) incl. padded ragged last tile.
    big_batch = 272
    x_big = jax.random.normal(k_x2, (big_batch, input_dim), jnp.float32)
    out_big = jax.block_until_ready(
        real_traffic_model_forward(x_big, folded, block_b=64))
    ref_big = reference_forward(x_big, params)
    assert out_big.shape == (big_batch, num_classes)
    assert jnp.allclose(out_big, ref_big, atol=1e-2, rtol=1e-2), (
        float(jnp.max(jnp.abs(out_big - ref_big))))

    print("KERNEL_OK")
</pallas_src>

<mosaic_0001>
module attributes {stable_mosaic.version = 11 : i64} {
  func.func @_mlp_kernel(%arg0: i32, %arg1: memref<8x32xf32, #tpu.memory_space<vmem>>, %arg2: memref<32x64xf32, #tpu.memory_space<vmem>>, %arg3: memref<1x64xf32, #tpu.memory_space<vmem>>, %arg4: memref<64x32xf32, #tpu.memory_space<vmem>>, %arg5: memref<1x32xf32, #tpu.memory_space<vmem>>, %arg6: memref<32x128xf32, #tpu.memory_space<vmem>>, %arg7: memref<1x128xf32, #tpu.memory_space<vmem>>, %arg8: memref<8x128xf32, #tpu.memory_space<vmem>>) attributes {dimension_semantics = [#tpu.dimension_semantics<parallel>], iteration_bounds = array<i64: 1>, scalar_prefetch = 0 : i64, scratch_operands = 0 : i64, tpu.core_type = #tpu.core_type<tc>, window_params = [{transform_indices = @transform_0, window_bounds = array<i64: 8, 32>}, {pipeline_mode = #tpu.pipeline_mode<synchronous>, transform_indices = @transform_1, window_bounds = array<i64: 32, 64>}, {pipeline_mode = #tpu.pipeline_mode<synchronous>, transform_indices = @transform_2, window_bounds = array<i64: 1, 64>}, {pipeline_mode = #tpu.pipeline_mode<synchronous>, transform_indices = @transform_3, window_bounds = array<i64: 64, 32>}, {pipeline_mode = #tpu.pipeline_mode<synchronous>, transform_indices = @transform_4, window_bounds = array<i64: 1, 32>}, {pipeline_mode = #tpu.pipeline_mode<synchronous>, transform_indices = @transform_5, window_bounds = array<i64: 32, 128>}, {pipeline_mode = #tpu.pipeline_mode<synchronous>, transform_indices = @transform_6, window_bounds = array<i64: 1, 128>}, {transform_indices = @transform_7, window_bounds = array<i64: 8, 128>}]} {
    %c0 = arith.constant 0 : index
    %c0_0 = arith.constant 0 : index
    %0 = vector.load %arg1[%c0, %c0_0] : memref<8x32xf32, #tpu.memory_space<vmem>>, vector<8x32xf32>
    %c0_1 = arith.constant 0 : index
    %c0_2 = arith.constant 0 : index
    %1 = vector.load %arg2[%c0_1, %c0_2] : memref<32x64xf32, #tpu.memory_space<vmem>>, vector<32x64xf32>
    %cst = arith.constant dense<0.000000e+00> : vector<8x64xf32>
    %2 = tpu.matmul %0, %1, %cst {dimension_numbers = #tpu.dot_dimension_numbers<[1], [0], [0], [1], [0, 0, 1, 1], [], []>} : vector<8x32xf32>, vector<32x64xf32>, vector<8x64xf32> -> vector<8x64xf32>
    %c0_3 = arith.constant 0 : index
    %c0_4 = arith.constant 0 : index
    %3 = vector.load %arg3[%c0_3, %c0_4] : memref<1x64xf32, #tpu.memory_space<vmem>>, vector<1x64xf32>
    %4 = vector.broadcast %3 : vector<1x64xf32> to vector<8x64xf32>
    %5 = arith.addf %2, %4 : vector<8x64xf32>
    %cst_5 = arith.constant 0.000000e+00 : f32
    %6 = vector.broadcast %cst_5 : f32 to vector<8x64xf32>
    %7 = arith.maximumf %5, %6 : vector<8x64xf32>
    %c0_6 = arith.constant 0 : index
    %c0_7 = arith.constant 0 : index
    %8 = vector.load %arg4[%c0_6, %c0_7] : memref<64x32xf32, #tpu.memory_space<vmem>>, vector<64x32xf32>
    %cst_8 = arith.constant dense<0.000000e+00> : vector<8x32xf32>
    %9 = tpu.matmul %7, %8, %cst_8 {dimension_numbers = #tpu.dot_dimension_numbers<[1], [0], [0], [1], [0, 0, 1, 1], [], []>} : vector<8x64xf32>, vector<64x32xf32>, vector<8x32xf32> -> vector<8x32xf32>
    %c0_9 = arith.constant 0 : index
    %c0_10 = arith.constant 0 : index
    %10 = vector.load %arg5[%c0_9, %c0_10] : memref<1x32xf32, #tpu.memory_space<vmem>>, vector<1x32xf32>
    %11 = vector.broadcast %10 : vector<1x32xf32> to vector<8x32xf32>
    %12 = arith.addf %9, %11 : vector<8x32xf32>
    %cst_11 = arith.constant 0.000000e+00 : f32
    %13 = vector.broadcast %cst_11 : f32 to vector<8x32xf32>
    %14 = arith.maximumf %12, %13 : vector<8x32xf32>
    %c0_12 = arith.constant 0 : index
    %c0_13 = arith.constant 0 : index
    %15 = vector.load %arg6[%c0_12, %c0_13] : memref<32x128xf32, #tpu.memory_space<vmem>>, vector<32x128xf32>
    %cst_14 = arith.constant dense<0.000000e+00> : vector<8x128xf32>
    %16 = tpu.matmul %14, %15, %cst_14 {dimension_numbers = #tpu.dot_dimension_numbers<[1], [0], [0], [1], [0, 0, 1, 1], [], []>} : vector<8x32xf32>, vector<32x128xf32>, vector<8x128xf32> -> vector<8x128xf32>
    %c0_15 = arith.constant 0 : index
    %c0_16 = arith.constant 0 : index
    %17 = vector.load %arg7[%c0_15, %c0_16] : memref<1x128xf32, #tpu.memory_space<vmem>>, vector<1x128xf32>
    %18 = vector.broadcast %17 : vector<1x128xf32> to vector<8x128xf32>
    %19 = arith.addf %16, %18 : vector<8x128xf32>
    %c0_17 = arith.constant 0 : index
    %c0_18 = arith.constant 0 : index
    %20 = vector.load %arg8[%c0_17, %c0_18] : memref<8x128xf32, #tpu.memory_space<vmem>>, vector<8x128xf32>
    tpu.vector_store %arg8[%c0_17, %c0_18], %19 {strides = array<i32>} : memref<8x128xf32, #tpu.memory_space<vmem>>, vector<8x128xf32>,
    return
  }
  func.func @transform_0(%arg0: i32) -> (i32, i32) {
    %c0_i32 = arith.constant 0 : i32
    %c0_i32_0 = arith.constant 0 : i32
    return %arg0, %c0_i32 : i32, i32
  }
  func.func @transform_1(%arg0: i32) -> (i32, i32) {
    %c0_i32 = arith.constant 0 : i32
    %c0_i32_0 = arith.constant 0 : i32
    %c0_i32_1 = arith.constant 0 : i32
    return %c0_i32, %c0_i32_0 : i32, i32
  }
  func.func @transform_2(%arg0: i32) -> (i32, i32) {
    %c0_i32 = arith.constant 0 : i32
    %c0_i32_0 = arith.constant 0 : i32
    %c0_i32_1 = arith.constant 0 : i32
    return %c0_i32, %c0_i32_0 : i32, i32
  }
  func.func @transform_3(%arg0: i32) -> (i32, i32) {
    %c0_i32 = arith.constant 0 : i32
    %c0_i32_0 = arith.constant 0 : i32
    %c0_i32_1 = arith.constant 0 : i32
    return %c0_i32, %c0_i32_0 : i32, i32
  }
  func.func @transform_4(%arg0: i32) -> (i32, i32) {
    %c0_i32 = arith.constant 0 : i32
    %c0_i32_0 = arith.constant 0 : i32
    %c0_i32_1 = arith.constant 0 : i32
    return %c0_i32, %c0_i32_0 : i32, i32
  }
  func.func @transform_5(%arg0: i32) -> (i32, i32) {
    %c0_i32 = arith.constant 0 : i32
    %c0_i32_0 = arith.constant 0 : i32
    %c0_i32_1 = arith.constant 0 : i32
    return %c0_i32, %c0_i32_0 : i32, i32
  }
  func.func @transform_6(%arg0: i32) -> (i32, i32) {
    %c0_i32 = arith.constant 0 : i32
    %c0_i32_0 = arith.constant 0 : i32
    %c0_i32_1 = arith.constant 0 : i32
    return %c0_i32, %c0_i32_0 : i32, i32
  }
  func.func @transform_7(%arg0: i32) -> (i32, i32) {
    %c0_i32 = arith.constant 0 : i32
    %c0_i32_0 = arith.constant 0 : i32
    return %arg0, %c0_i32 : i32, i32
  }
}

</mosaic_0001>

<llo_original>
// kernel: tpu_custom_call.1
$region0: #{tpu_custom_call.1}
  #allocation0 [shape = 'u32[]', space=smem, size = 0x4, offset = 0x4, fixed_abs, tag = 'smem constant byte address 0x4 - core index']
  #allocation1 [shape = 'u32[72,128]{1,0:T(1,128)}', space=vmem, size = 0x9000, scoped, tag = 'internal scratch']
  %s0 = inlined_call_operand.vmem [shape: f32[8,32], index: 0, kind: input, shape index: {}]
  %s1 = inlined_call_operand.vmem [shape: f32[32,64], index: 1, kind: input, shape index: {}]
  %s2 = inlined_call_operand.vmem [shape: f32[1,64], index: 2, kind: input, shape index: {}]
  %s3 = inlined_call_operand.vmem [shape: f32[64,32], index: 3, kind: input, shape index: {}]
  %s4 = inlined_call_operand.vmem [shape: f32[1,32], index: 4, kind: input, shape index: {}]
  %s5 = inlined_call_operand.vmem [shape: f32[32,128], index: 5, kind: input, shape index: {}]
  %s6 = inlined_call_operand.vmem [shape: f32[1,128], index: 6, kind: input, shape index: {}]
  %s7 = inlined_call_operand.hbm [shape: f32[8,128], index: 7, kind: output, shape index: {}]
  %s8 = sld [smem:[#allocation0]]
  $region38: #{tpu_custom_call.1} parent=0
    _
  %s10 = ssub.s32 1, %s8
  %s11 = scalar_select 0, %s10, %s8
  $region1: #{tpu_custom_call.1} parent=0
    #allocation2 [shape = 'u8[4096]{0}', space=vmem, size = 0x1000, scoped, tag = 'output window, operand 0, single buffered']
    #allocation3 [shape = 's32[1]{0}', space=sflag, size = 0x4, scoped, tag = 'scoped memory for tpu_custom_call.1']
    %12 = vsyncpa [#allocation3], 0
    // Predicated region
    $region2: #{tpu_custom_call.1} parent=1 // pred_check
      _
    $region3: #{tpu_custom_call.1} parent=1 // pred_check_branch
      %14 = sbr.rel (0) target = $region5
    $region4: #{tpu_custom_call.1} parent=1 // pred_region
      _
    $region5: #{tpu_custom_call.1} parent=1 // pred_fallthru
      _
    // Predicated region
    $region6: #{tpu_custom_call.1} parent=1 // pred_check
      _
    $region7: #{tpu_custom_call.1} parent=1 // pred_check_branch
      %16 = sbr.rel (0) target = $region9
    $region8: #{tpu_custom_call.1} parent=1 // pred_region
      _
    $region9: #{tpu_custom_call.1} parent=1 // pred_fallthru
      _
    // Predicated region
    $region10: #{tpu_custom_call.1} parent=1 // pred_check
      _
    $region11: #{tpu_custom_call.1} parent=1 // pred_check_branch
      %18 = sbr.rel (0) target = $region13
    $region12: #{tpu_custom_call.1} parent=1 // pred_region
      _
    $region13: #{tpu_custom_call.1} parent=1 // pred_fallthru
      _
    // Predicated region
    $region14: #{tpu_custom_call.1} parent=1 // pred_check
      _
    $region15: #{tpu_custom_call.1} parent=1 // pred_check_branch
      %20 = sbr.rel (0) target = $region17
    $region16: #{tpu_custom_call.1} parent=1 // pred_region
      _
    $region17: #{tpu_custom_call.1} parent=1 // pred_fallthru
      _
    // Predicated region
    $region18: #{tpu_custom_call.1} parent=1 // pred_check
      _
    $region19: #{tpu_custom_call.1} parent=1 // pred_check_branch
      %22 = sbr.rel (0) target = $region21
    $region20: #{tpu_custom_call.1} parent=1 // pred_region
      _
    $region21: #{tpu_custom_call.1} parent=1 // pred_fallthru
      _
    // Predicated region
    $region22: #{tpu_custom_call.1} parent=1 // pred_check
      _
    $region23: #{tpu_custom_call.1} parent=1 // pred_check_branch
      %24 = sbr.rel (0) target = $region25
    $region24: #{tpu_custom_call.1} parent=1 // pred_region
      _
    $region25: #{tpu_custom_call.1} parent=1 // pred_fallthru
      _
    // Predicated region
    $region26: #{tpu_custom_call.1} parent=1 // pred_check
      _
    $region27: #{tpu_custom_call.1} parent=1 // pred_check_branch
      %26 = sbr.rel (0) target = $region29
    $region28: #{tpu_custom_call.1} parent=1 // pred_region
      _
    $region29: #{tpu_custom_call.1} parent=1 // pred_fallthru
      _
    %v27 = vld [vmem:[%s0] sm:$0xff]
    %v28 = vld [vmem:[%s1] sm:$0xff]
    %v29 = vld [vmem:[%s1 + $0x8] sm:$0xff]
    %v30 = vld [vmem:[%s1 + $0x10] sm:$0xff]
    %v31 = vld [vmem:[%s1 + $0x18] sm:$0xff]
    %v32 = vld [vmem:[%s2] sm:$0x1]
    %v34 = vperm.slane %v32, 0
    %vm36 = vcmask 261120
    %v38 = vsel %vm36, %v27, 0
    %40 = vmatpush.msra.mxu0 0.0
    %41 = vmatpush.msra.mxu0 0.0
    %42 = vmatpush.msra.mxu0 0.0
    %43 = vmatpush.msra.mxu0 0.0
    %44 = vmatpush.msra.mxu0 0.0
    %45 = vmatpush.msra.mxu0 0.0
    %46 = vmatpush.msra.mxu0 0.0
    %47 = vmatpush.msra.mxu0 0.0
    %48 = vmatpush.msra.mxu0 0.0
    %49 = vmatpush.msra.mxu0 0.0
    %50 = vmatpush.msra.mxu0 0.0
    %51 = vmatpush.msra.mxu0 0.0
    %52 = vmatpush.msra.mxu0 %v31
    %53 = vmatpush.msra.mxu0 %v30
    %54 = vmatpush.msra.mxu0 %v29
    %55 = vmatpush.msra.mxu0 %v28
    %56 = vmatmul.f32.gmra.mxu0 %v38
    %v57 = vpop.f32.mrf.mxu0
    %v58 = vadd.f32 %v34, %v57
    %59 = vdwg.mxu0
    %v60 = vmax.f32 %v58, 0.0
    %v61 = vld [vmem:[%s3] sm:$0xff]
    %v62 = vld [vmem:[%s3 + $0x8] sm:$0xff]
    %v63 = vld [vmem:[%s3 + $0x10] sm:$0xff]
    %v64 = vld [vmem:[%s3 + $0x18] sm:$0xff]
    %v65 = vld [vmem:[%s3 + $0x20] sm:$0xff]
    %v66 = vld [vmem:[%s3 + $0x28] sm:$0xff]
    %v67 = vld [vmem:[%s3 + $0x30] sm:$0xff]
    %v68 = vld [vmem:[%s3 + $0x38] sm:$0xff]
    %v69 = vld [vmem:[%s4] sm:$0x1]
    %v71 = vperm.slane %v69, 0
    %vm73 = vcmask 523264
    %v75 = vsel %vm73, %v60, 0
    %77 = vmatpush.msra.mxu0 0.0
    %78 = vmatpush.msra.mxu0 0.0
    %79 = vmatpush.msra.mxu0 0.0
    %80 = vmatpush.msra.mxu0 0.0
    %81 = vmatpush.msra.mxu0 0.0
    %82 = vmatpush.msra.mxu0 0.0
    %83 = vmatpush.msra.mxu0 0.0
    %84 = vmatpush.msra.mxu0 0.0
    %85 = vmatpush.msra.mxu0 %v68
    %86 = vmatpush.msra.mxu0 %v67
    %87 = vmatpush.msra.mxu0 %v66
    %88 = vmatpush.msra.mxu0 %v65
    %89 = vmatpush.msra.mxu0 %v64
    %90 = vmatpush.msra.mxu0 %v63
    %91 = vmatpush.msra.mxu0 %v62
    %92 = vmatpush.msra.mxu0 %v61
    %93 = vmatmul.f32.gmra.mxu0 %v75
    %v94 = vpop.f32.mrf.mxu0
    %v95 = vadd.f32 %v71, %v94
    %96 = vdwg.mxu0
    %v97 = vmax.f32 %v95, 0.0
    %v98 = vld [vmem:[%s5] sm:$0xff]
    %v99 = vld [vmem:[%s5 + $0x8] sm:$0xff]
    %v100 = vld [vmem:[%s5 + $0x10] sm:$0xff]
    %v101 = vld [vmem:[%s5 + $0x18] sm:$0xff]
    %v102 = vld [vmem:[%s6] sm:$0x1]
    %v104 = vperm.slane %v102, 0
    %v107 = vsel %vm36, %v97, 0
    %109 = vmatpush.msra.mxu0 0.0
    %110 = vmatpush.msra.mxu0 0.0
    %111 = vmatpush.msra.mxu0 0.0
    %112 = vmatpush.msra.mxu0 0.0
    %113 = vmatpush.msra.mxu0 0.0
    %114 = vmatpush.msra.mxu0 0.0
    %115 = vmatpush.msra.mxu0 0.0
    %116 = vmatpush.msra.mxu0 0.0
    %117 = vmatpush.msra.mxu0 0.0
    %118 = vmatpush.msra.mxu0 0.0
    %119 = vmatpush.msra.mxu0 0.0
    %120 = vmatpush.msra.mxu0 0.0
    %121 = vmatpush.msra.mxu0 %v101
    %122 = vmatpush.msra.mxu0 %v100
    %123 = vmatpush.msra.mxu0 %v99
    %124 = vmatpush.msra.mxu0 %v98
    %125 = vmatmul.f32.gmra.mxu0 %v107
    %v126 = vpop.f32.mrf.mxu0
    %v127 = vadd.f32 %v104, %v126
    %128 = vdwg.mxu0
    %129 = vst [vmem:[#allocation2] sm:$0xff] %v127
    // Predicated region
    $region30: #{tpu_custom_call.1} parent=1 // pred_check
      _
    $region31: #{tpu_custom_call.1} parent=1 // pred_check_branch
      %131 = sbr.rel (0) target = $region33
    $region32: #{tpu_custom_call.1} parent=1 // pred_region
      %133 = vsyncadd [#allocation3], 0
      %s135 = sshll.u32 [#allocation2], 4
      %s136 = int_to_ptr.vmem [resolvable:$true] %s135
      %s137 = sshll.u32 %s7, 4
      %s138 = int_to_ptr.hbm [resolvable:$true] %s137
      %140 = dma.vmem_to_hbm [thread:$0]  %s136, 128, %s138, [#allocation3]
    $region33: #{tpu_custom_call.1} parent=1 // pred_fallthru
      _
    // Predicated region
    $region34: #{tpu_custom_call.1} parent=1 // pred_check
      _
    $region35: #{tpu_custom_call.1} parent=1 // pred_check_branch
      %142 = sbr.rel (0) target = $region37
    $region36: #{tpu_custom_call.1} parent=1 // pred_region
      %144 = dma.done [#allocation3], 128
    $region37: #{tpu_custom_call.1} parent=1 // pred_fallthru
      _
    %145 = vsyncpa [#allocation3], 1

</llo_original>
